<compile_context>
chip_gen: v6e
topology: v6e:2x2x1
jax: 0.10.0
libtpu: 0.0.40
codegen_flags: <defaults>
</compile_context>

<pallas_src>
import math
import numpy as np
import jax
import jax.numpy as jnp
from jax import lax
from jax.experimental import pallas as pl
from jax.experimental.pallas import tpu as pltpu

D_MODEL = 32          # config.d_model
LN_EPS = 1e-5         # config.layer_norm_eps (nn.LayerNorm default)


def _round_up(x, m):
    return (x + m - 1) // m * m


def _pick_block_batch(B, T):
    """Per-step batch block: >=512 MXU rows per block and >=4 pipeline steps
    when the batch size allows it (>=2 steps also feeds both v7x TensorCores
    through the 'parallel' grid axis).  Must divide B."""
    cap_rows = max(1, 512 // max(T, 1))      # keep blocks >= 512 matmul rows
    cap_steps = max(1, B // 4)               # keep >= 4 grid steps
    cap = max(1, min(cap_rows, cap_steps))
    bblk = 1
    for d in range(1, cap + 1):
        if B % d == 0:
            bblk = d
    # (8,128) rule: the (Bblk*T, S) states block needs a second-minor dim
    # divisible by 8 unless it equals the full extent.
    if (bblk * T) % 8 != 0 and bblk != B:
        bblk = B
    return bblk


def trajectory_processor(states, actions, states_att_mask, actions_att_mask,
                         params, *, block_batch=None):
    """JAX wrapper reproducing TrajectoryProcessor.forward semantics."""
    B, T = actions.shape
    S, D = params["w"].shape
    A = params["act_table"].shape[0]
    L = 2 * T + 1
    scale = math.sqrt(D)

    Bblk = block_batch if block_batch is not None else _pick_block_batch(B, T)
    assert B % Bblk == 0
    n_blocks = B // Bblk

    # Free HBM reshapes (no wrapper astype pass; the cast to f32 happens
    # in-kernel, which also lets native sub-f32 state dtypes halve the DMA).
    states2d = states.reshape(B * T, S)                    # (B*T, S)
    act2d = actions.astype(jnp.int32).reshape(B * T, 1)    # (B*T, 1)

    pos_t = params["pos_table"].astype(jnp.float32)

    # Normalized cls row is batch-independent: 32 floats, computed once here
    # and packed into the param table so the kernel just stores it to row 0.
    x0 = params["cls"].astype(jnp.float32) * scale + pos_t[0]
    m0 = x0.mean()
    v0 = ((x0 - m0) ** 2).mean()
    cls_norm = (x0 - m0) * lax.rsqrt(v0 + LN_EPS) * params["gamma"] + params["beta"]

    # ---- pack all small per-row params into one sublane-aligned (R, D) table
    # (sqrt(d_model) folded into bias and action table; W is pre-scaled too:
    #  ReLU(xW+b)*s == ReLU(x(W*s)+b*s) and table lookups scale linearly).
    # rows [0, T)          : position rows for state tokens   (pos[1::2])
    # rows [T, 2T)         : position rows for action tokens  (pos[2::2])
    # rows 2T..2T+3        : b*s / LN gamma / LN beta / normalized cls row
    # rows [2T+4, 2T+4+A)  : action embedding table * s
    R_raw = 2 * T + 4 + A
    R = _round_up(R_raw, 8)
    table = jnp.concatenate([
        pos_t[1::2],                                       # (T, D)
        pos_t[2::2],                                       # (T, D)
        (params["b"].astype(jnp.float32) * scale).reshape(1, D),
        params["gamma"].astype(jnp.float32).reshape(1, D),
        params["beta"].astype(jnp.float32).reshape(1, D),
        cls_norm.reshape(1, D),
        params["act_table"].astype(jnp.float32) * scale,   # (A, D)
        jnp.zeros((R - R_raw, D), jnp.float32),
    ], axis=0)
    w_scaled = params["w"].astype(jnp.float32) * scale

    OFF_POS_S, OFF_POS_A = 0, T
    OFF_B, OFF_G, OFF_BETA, OFF_CLS, OFF_ACT = 2 * T, 2 * T + 1, 2 * T + 2, 2 * T + 3, 2 * T + 4

    def kernel(states_ref, act_ref, w_ref, tbl_ref, out_ref):
        # states_ref (Bblk*T, S) any float/int dtype ; act_ref (Bblk*T, 1) i32
        # w_ref (S, D) f32 (pre-scaled) ; tbl_ref (R, D) f32
        # out_ref (Bblk, 2T+1, D) f32  -- complete embedding rows incl. cls
        # state tokens: one (Bblk*T, S) @ (S, D) MXU matmul + bias + ReLU
        xs = states_ref[...].astype(jnp.float32)
        s_emb = jnp.dot(xs, w_ref[...], preferred_element_type=jnp.float32)
        b_row = tbl_ref[OFF_B, :].reshape(1, 1, D)
        # NOTE: leading-dim split; byte-identical when (Bblk*T) % 8 == 0.
        s_emb = jnp.maximum(s_emb.reshape(Bblk, T, D) + b_row, 0.0)

        # action tokens: A VPU select-accumulates (broadcast hoisted out of
        # the loop, row selected directly -- no one-hot, no mask*row multiply)
        act_b = jnp.broadcast_to(act_ref[...], (Bblk * T, D))    # int32
        a_emb = jnp.zeros((Bblk * T, D), jnp.float32)
        for k in range(A):
            row = tbl_ref[OFF_ACT + k, :].reshape(1, D)
            a_emb = a_emb + jnp.where(act_b == k, row, 0.0)
        a_emb = a_emb.reshape(Bblk, T, D)

        gamma = tbl_ref[OFF_G, :].reshape(1, 1, D)
        beta = tbl_ref[OFF_BETA, :].reshape(1, 1, D)
        pos_s = tbl_ref[OFF_POS_S:OFF_POS_S + T, :].reshape(1, T, D)
        pos_a = tbl_ref[OFF_POS_A:OFF_POS_A + T, :].reshape(1, T, D)

        def ln(x):
            mean = jnp.mean(x, axis=-1, keepdims=True)
            var = jnp.mean(jnp.square(x - mean), axis=-1, keepdims=True)
            return (x - mean) * lax.rsqrt(var + LN_EPS) * gamma + beta

        # embeddings = tokens*sqrt(d) + pos (scale pre-folded), then LayerNorm
        y_s = ln(s_emb + pos_s)
        y_a = ln(a_emb + pos_a)

        # Full output assembly in-kernel (no wrapper concat / extra HBM pass):
        # row 0 = cls, rows (1+2t, 2+2t) = (state_t, action_t).
        cls_row = tbl_ref[OFF_CLS, :].reshape(1, 1, D)
        out_ref[:, 0:1, :] = jnp.broadcast_to(cls_row, (Bblk, 1, D))
        for t in range(T):  # static unroll; T (max_seq_length) is small here
            pair = jnp.concatenate(
                [y_s[:, t:t + 1, :], y_a[:, t:t + 1, :]], axis=1)  # (Bblk,2,D)
            out_ref[:, 2 * t + 1:2 * t + 3, :] = pair

    # VMEM budget derived from actual block sizes (v7x has only 64 MiB).
    blk_bytes = (Bblk * T * S * states2d.dtype.itemsize
                 + Bblk * T * 4
                 + Bblk * L * D * 4)
    fixed_bytes = (S * D + R * D) * 4
    vmem_limit = int(max(16 * 1024 * 1024,
                         min(48 * 1024 * 1024,
                             4 * blk_bytes + 2 * fixed_bytes + 8 * 1024 * 1024)))

    embeddings = pl.pallas_call(
        kernel,
        out_shape=jax.ShapeDtypeStruct((B, L, D), jnp.float32),
        grid_spec=pltpu.PrefetchScalarGridSpec(
            num_scalar_prefetch=0,
            grid=(n_blocks,),
            in_specs=[
                pl.BlockSpec((Bblk * T, S), lambda i: (i, 0)),   # states
                pl.BlockSpec((Bblk * T, 1), lambda i: (i, 0)),   # actions (i32)
                pl.BlockSpec((S, D), lambda i: (0, 0)),          # W * sqrt(d)
                pl.BlockSpec((R, D), lambda i: (0, 0)),          # packed params
            ],
            out_specs=pl.BlockSpec((Bblk, L, D), lambda i: (i, 0, 0)),
        ),
        compiler_params=pltpu.CompilerParams(
            dimension_semantics=("parallel",),
            vmem_limit_bytes=vmem_limit),
    )(states2d, act2d, w_scaled, table)

    # attention mask: trivially cheap prefix-threshold, exactly as the PyTorch
    # module computes it (positions >= sum(s_mask)+sum(a_mask) are masked).
    msize = (states_att_mask.astype(jnp.int32).sum(-1, keepdims=True)
             + actions_att_mask.astype(jnp.int32).sum(-1, keepdims=True))
    idx = jnp.arange(2 * T, dtype=jnp.int32)[None, :]
    m = jnp.where(idx >= msize, 1.0, 0.0).astype(jnp.float32)
    att_mask = jnp.concatenate([jnp.zeros((B, 1), jnp.float32), m], axis=1)

    # TODO(synk): nn.Dropout is stochastic in train mode; treated as identity (inference).
    return embeddings, att_mask


def reference(states, actions, states_att_mask, actions_att_mask, params):
    """Pure-JAX reference mirroring the PyTorch forward exactly."""
    B, T = actions.shape
    D = params["w"].shape[1]
    states_flat = states.reshape(B, T, -1).astype(jnp.float32)
    s_emb = jnp.maximum(states_flat @ params["w"] + params["b"], 0.0)
    a_emb = params["act_table"][actions]
    inter = jnp.stack([s_emb, a_emb], axis=2).reshape(B, 2 * T, D)
    cls = jnp.broadcast_to(params["cls"], (B, 1, D))
    inp = jnp.concatenate([cls, inter], axis=1)
    x = inp * math.sqrt(D) + params["pos_table"][None]
    mean = x.mean(-1, keepdims=True)
    var = ((x - mean) ** 2).mean(-1, keepdims=True)
    y = (x - mean) / jnp.sqrt(var + LN_EPS) * params["gamma"] + params["beta"]
    msize = (states_att_mask.astype(jnp.int32).sum(-1, keepdims=True)
             + actions_att_mask.astype(jnp.int32).sum(-1, keepdims=True))
    idx = jnp.arange(2 * T)[None, :]
    m = jnp.where(idx >= msize, 1.0, 0.0)
    m = jnp.concatenate([jnp.zeros((B, 1), jnp.float32), m], axis=1)
    return y, m


if __name__ == "__main__":
    B, T = 2, 8                  # batch, max_seq_length (traj_length == max_seq_length)
    GH, GW = 8, 8                # grid-world state spatial dims -> state_size = 64
    S = GH * GW
    A = 6                        # num_actions
    D = D_MODEL

    key = jax.random.PRNGKey(0)
    ks = jax.random.split(key, 8)

    states = jax.random.normal(ks[0], (B, T, GH, GW), dtype=jnp.float32)
    actions = jax.random.randint(ks[1], (B, T), 0, A, dtype=jnp.int32)
    lens_s = jnp.array([[T], [5]], dtype=jnp.int32)
    lens_a = jnp.array([[T - 1], [5]], dtype=jnp.int32)
    states_att_mask = (jnp.arange(T)[None, :] < lens_s).astype(jnp.int32)
    actions_att_mask = (jnp.arange(T)[None, :] < lens_a).astype(jnp.int32)

    params = {
        "w": 0.02 * jax.random.normal(ks[2], (S, D), dtype=jnp.float32),
        "b": 0.02 * jax.random.normal(ks[3], (D,), dtype=jnp.float32),
        "act_table": jax.random.normal(ks[4], (A, D), dtype=jnp.float32),
        "pos_table": jax.random.normal(ks[5], (2 * T + 1, D), dtype=jnp.float32),
        "cls": jax.random.normal(ks[6], (D,), dtype=jnp.float32),
        "gamma": jnp.ones((D,), dtype=jnp.float32),
        "beta": jnp.zeros((D,), dtype=jnp.float32),
    }

    emb, mask = trajectory_processor(states, actions, states_att_mask,
                                     actions_att_mask, params)
    jax.block_until_ready((emb, mask))

    emb_ref, mask_ref = reference(states, actions, states_att_mask,
                                  actions_att_mask, params)
    assert emb.shape == (B, 2 * T + 1, D) and mask.shape == (B, 2 * T + 1)
    np.testing.assert_allclose(np.asarray(emb), np.asarray(emb_ref), rtol=1e-4, atol=1e-4)
    np.testing.assert_allclose(np.asarray(mask), np.asarray(mask_ref), rtol=0, atol=0)
    print("KERNEL_OK")
</pallas_src>

<mosaic_0001>
module attributes {stable_mosaic.version = 11 : i64} {
  func.func @kernel(%arg0: i32, %arg1: memref<8x64xf32, #tpu.memory_space<vmem>>, %arg2: memref<8x1xi32, #tpu.memory_space<vmem>>, %arg3: memref<64x32xf32, #tpu.memory_space<vmem>>, %arg4: memref<32x32xf32, #tpu.memory_space<vmem>>, %arg5: memref<1x17x32xf32, #tpu.memory_space<vmem>>) attributes {dimension_semantics = [#tpu.dimension_semantics<parallel>], iteration_bounds = array<i64: 2>, scalar_prefetch = 0 : i64, scratch_operands = 0 : i64, tpu.core_type = #tpu.core_type<tc>, window_params = [{transform_indices = @transform_0, window_bounds = array<i64: 8, 64>}, {transform_indices = @transform_1, window_bounds = array<i64: 8, 1>}, {pipeline_mode = #tpu.pipeline_mode<synchronous>, transform_indices = @transform_2, window_bounds = array<i64: 64, 32>}, {pipeline_mode = #tpu.pipeline_mode<synchronous>, transform_indices = @transform_3, window_bounds = array<i64: 32, 32>}, {transform_indices = @transform_4, window_bounds = array<i64: 1, 17, 32>}]} {
    %c0 = arith.constant 0 : index
    %c0_0 = arith.constant 0 : index
    %0 = vector.load %arg1[%c0, %c0_0] : memref<8x64xf32, #tpu.memory_space<vmem>>, vector<8x64xf32>
    %c0_1 = arith.constant 0 : index
    %c0_2 = arith.constant 0 : index
    %1 = vector.load %arg3[%c0_1, %c0_2] : memref<64x32xf32, #tpu.memory_space<vmem>>, vector<64x32xf32>
    %cst = arith.constant dense<0.000000e+00> : vector<8x32xf32>
    %2 = tpu.matmul %0, %1, %cst {dimension_numbers = #tpu.dot_dimension_numbers<[1], [0], [0], [1], [0, 0, 1, 1], [], []>} : vector<8x64xf32>, vector<64x32xf32>, vector<8x32xf32> -> vector<8x32xf32>
    %c16 = arith.constant 16 : index
    %c0_3 = arith.constant 0 : index
    %3 = vector.load %arg4[%c16, %c0_3] : memref<32x32xf32, #tpu.memory_space<vmem>>, vector<1x32xf32>
    %4 = vector.shape_cast %3 : vector<1x32xf32> to vector<32xf32>
    %5 = vector.shape_cast %4 : vector<32xf32> to vector<1x1x32xf32>
    %6 = vector.shape_cast %2 : vector<8x32xf32> to vector<1x8x32xf32>
    %7 = vector.broadcast %5 : vector<1x1x32xf32> to vector<1x8x32xf32>
    %8 = arith.addf %6, %7 : vector<1x8x32xf32>
    %cst_4 = arith.constant 0.000000e+00 : f32
    %9 = vector.broadcast %cst_4 : f32 to vector<1x8x32xf32>
    %10 = arith.maximumf %8, %9 : vector<1x8x32xf32>
    %c0_5 = arith.constant 0 : index
    %c0_6 = arith.constant 0 : index
    %11 = vector.load %arg2[%c0_5, %c0_6] : memref<8x1xi32, #tpu.memory_space<vmem>>, vector<8x1xi32>
    %12 = vector.shape_cast %11 : vector<8x1xi32> to vector<8x1xi32>
    %13 = vector.broadcast %12 : vector<8x1xi32> to vector<8x32xi32>
    %cst_7 = arith.constant 0.000000e+00 : f32
    %14 = vector.broadcast %cst_7 : f32 to vector<8x32xf32>
    %c20 = arith.constant 20 : index
    %c0_8 = arith.constant 0 : index
    %15 = vector.load %arg4[%c20, %c0_8] : memref<32x32xf32, #tpu.memory_space<vmem>>, vector<1x32xf32>
    %16 = vector.shape_cast %15 : vector<1x32xf32> to vector<32xf32>
    %17 = vector.shape_cast %16 : vector<32xf32> to vector<1x32xf32>
    %c0_i32 = arith.constant 0 : i32
    %18 = vector.broadcast %c0_i32 : i32 to vector<8x32xi32>
    %19 = arith.cmpi eq, %13, %18 : vector<8x32xi32>
    %cst_9 = arith.constant 0.000000e+00 : f32
    %20 = vector.shape_cast %17 : vector<1x32xf32> to vector<1x32xf32>
    %21 = vector.broadcast %20 : vector<1x32xf32> to vector<8x32xf32>
    %22 = vector.broadcast %cst_9 : f32 to vector<8x32xf32>
    %23 = arith.select %19, %21, %22 : vector<8x32xi1>, vector<8x32xf32>
    %24 = arith.addf %14, %23 : vector<8x32xf32>
    %c21 = arith.constant 21 : index
    %c0_10 = arith.constant 0 : index
    %25 = vector.load %arg4[%c21, %c0_10] : memref<32x32xf32, #tpu.memory_space<vmem>>, vector<1x32xf32>
    %26 = vector.shape_cast %25 : vector<1x32xf32> to vector<32xf32>
    %27 = vector.shape_cast %26 : vector<32xf32> to vector<1x32xf32>
    %c1_i32 = arith.constant 1 : i32
    %28 = vector.broadcast %c1_i32 : i32 to vector<8x32xi32>
    %29 = arith.cmpi eq, %13, %28 : vector<8x32xi32>
    %cst_11 = arith.constant 0.000000e+00 : f32
    %30 = vector.shape_cast %27 : vector<1x32xf32> to vector<1x32xf32>
    %31 = vector.broadcast %30 : vector<1x32xf32> to vector<8x32xf32>
    %32 = vector.broadcast %cst_11 : f32 to vector<8x32xf32>
    %33 = arith.select %29, %31, %32 : vector<8x32xi1>, vector<8x32xf32>
    %34 = arith.addf %24, %33 : vector<8x32xf32>
    %c22 = arith.constant 22 : index
    %c0_12 = arith.constant 0 : index
    %35 = vector.load %arg4[%c22, %c0_12] : memref<32x32xf32, #tpu.memory_space<vmem>>, vector<1x32xf32>
    %36 = vector.shape_cast %35 : vector<1x32xf32> to vector<32xf32>
    %37 = vector.shape_cast %36 : vector<32xf32> to vector<1x32xf32>
    %c2_i32 = arith.constant 2 : i32
    %38 = vector.broadcast %c2_i32 : i32 to vector<8x32xi32>
    %39 = arith.cmpi eq, %13, %38 : vector<8x32xi32>
    %cst_13 = arith.constant 0.000000e+00 : f32
    %40 = vector.shape_cast %37 : vector<1x32xf32> to vector<1x32xf32>
    %41 = vector.broadcast %40 : vector<1x32xf32> to vector<8x32xf32>
    %42 = vector.broadcast %cst_13 : f32 to vector<8x32xf32>
    %43 = arith.select %39, %41, %42 : vector<8x32xi1>, vector<8x32xf32>
    %44 = arith.addf %34, %43 : vector<8x32xf32>
    %c23 = arith.constant 23 : index
    %c0_14 = arith.constant 0 : index
    %45 = vector.load %arg4[%c23, %c0_14] : memref<32x32xf32, #tpu.memory_space<vmem>>, vector<1x32xf32>
    %46 = vector.shape_cast %45 : vector<1x32xf32> to vector<32xf32>
    %47 = vector.shape_cast %46 : vector<32xf32> to vector<1x32xf32>
    %c3_i32 = arith.constant 3 : i32
    %48 = vector.broadcast %c3_i32 : i32 to vector<8x32xi32>
    %49 = arith.cmpi eq, %13, %48 : vector<8x32xi32>
    %cst_15 = arith.constant 0.000000e+00 : f32
    %50 = vector.shape_cast %47 : vector<1x32xf32> to vector<1x32xf32>
    %51 = vector.broadcast %50 : vector<1x32xf32> to vector<8x32xf32>
    %52 = vector.broadcast %cst_15 : f32 to vector<8x32xf32>
    %53 = arith.select %49, %51, %52 : vector<8x32xi1>, vector<8x32xf32>
    %54 = arith.addf %44, %53 : vector<8x32xf32>
    %c24 = arith.constant 24 : index
    %c0_16 = arith.constant 0 : index
    %55 = vector.load %arg4[%c24, %c0_16] : memref<32x32xf32, #tpu.memory_space<vmem>>, vector<1x32xf32>
    %56 = vector.shape_cast %55 : vector<1x32xf32> to vector<32xf32>
    %57 = vector.shape_cast %56 : vector<32xf32> to vector<1x32xf32>
    %c4_i32 = arith.constant 4 : i32
    %58 = vector.broadcast %c4_i32 : i32 to vector<8x32xi32>
    %59 = arith.cmpi eq, %13, %58 : vector<8x32xi32>
    %cst_17 = arith.constant 0.000000e+00 : f32
    %60 = vector.shape_cast %57 : vector<1x32xf32> to vector<1x32xf32>
    %61 = vector.broadcast %60 : vector<1x32xf32> to vector<8x32xf32>
    %62 = vector.broadcast %cst_17 : f32 to vector<8x32xf32>
    %63 = arith.select %59, %61, %62 : vector<8x32xi1>, vector<8x32xf32>
    %64 = arith.addf %54, %63 : vector<8x32xf32>
    %c25 = arith.constant 25 : index
    %c0_18 = arith.constant 0 : index
    %65 = vector.load %arg4[%c25, %c0_18] : memref<32x32xf32, #tpu.memory_space<vmem>>, vector<1x32xf32>
    %66 = vector.shape_cast %65 : vector<1x32xf32> to vector<32xf32>
    %67 = vector.shape_cast %66 : vector<32xf32> to vector<1x32xf32>
    %c5_i32 = arith.constant 5 : i32
    %68 = vector.broadcast %c5_i32 : i32 to vector<8x32xi32>
    %69 = arith.cmpi eq, %13, %68 : vector<8x32xi32>
    %cst_19 = arith.constant 0.000000e+00 : f32
    %70 = vector.shape_cast %67 : vector<1x32xf32> to vector<1x32xf32>
    %71 = vector.broadcast %70 : vector<1x32xf32> to vector<8x32xf32>
    %72 = vector.broadcast %cst_19 : f32 to vector<8x32xf32>
    %73 = arith.select %69, %71, %72 : vector<8x32xi1>, vector<8x32xf32>
    %74 = arith.addf %64, %73 : vector<8x32xf32>
    %75 = vector.shape_cast %74 : vector<8x32xf32> to vector<1x8x32xf32>
    %c17 = arith.constant 17 : index
    %c0_20 = arith.constant 0 : index
    %76 = vector.load %arg4[%c17, %c0_20] : memref<32x32xf32, #tpu.memory_space<vmem>>, vector<1x32xf32>
    %77 = vector.shape_cast %76 : vector<1x32xf32> to vector<32xf32>
    %78 = vector.shape_cast %77 : vector<32xf32> to vector<1x1x32xf32>
    %c18 = arith.constant 18 : index
    %c0_21 = arith.constant 0 : index
    %79 = vector.load %arg4[%c18, %c0_21] : memref<32x32xf32, #tpu.memory_space<vmem>>, vector<1x32xf32>
    %80 = vector.shape_cast %79 : vector<1x32xf32> to vector<32xf32>
    %81 = vector.shape_cast %80 : vector<32xf32> to vector<1x1x32xf32>
    %c0_22 = arith.constant 0 : index
    %c0_23 = arith.constant 0 : index
    %82 = vector.load %arg4[%c0_22, %c0_23] : memref<32x32xf32, #tpu.memory_space<vmem>>, vector<8x32xf32>
    %83 = vector.shape_cast %82 : vector<8x32xf32> to vector<1x8x32xf32>
    %c8 = arith.constant 8 : index
    %c0_24 = arith.constant 0 : index
    %84 = vector.load %arg4[%c8, %c0_24] : memref<32x32xf32, #tpu.memory_space<vmem>>, vector<8x32xf32>
    %85 = vector.shape_cast %84 : vector<8x32xf32> to vector<1x8x32xf32>
    %86 = arith.addf %10, %83 : vector<1x8x32xf32>
    %cst_25 = arith.constant dense<0.000000e+00> : vector<1x8xf32>
    %87 = vector.multi_reduction <add>, %86, %cst_25 [2] : vector<1x8x32xf32> to vector<1x8xf32>
    %88 = vector.shape_cast %87 : vector<1x8xf32> to vector<1x8x1xf32>
    %cst_26 = arith.constant 3.200000e+01 : f32
    %89 = vector.broadcast %cst_26 : f32 to vector<1x8x1xf32>
    %90 = arith.divf %88, %89 : vector<1x8x1xf32>
    %91 = vector.broadcast %90 : vector<1x8x1xf32> to vector<1x8x32xf32>
    %92 = arith.subf %86, %91 : vector<1x8x32xf32>
    %93 = arith.mulf %92, %92 : vector<1x8x32xf32>
    %cst_27 = arith.constant dense<0.000000e+00> : vector<1x8xf32>
    %94 = vector.multi_reduction <add>, %93, %cst_27 [2] : vector<1x8x32xf32> to vector<1x8xf32>
    %95 = vector.shape_cast %94 : vector<1x8xf32> to vector<1x8x1xf32>
    %cst_28 = arith.constant 3.200000e+01 : f32
    %96 = vector.broadcast %cst_28 : f32 to vector<1x8x1xf32>
    %97 = arith.divf %95, %96 : vector<1x8x1xf32>
    %98 = vector.broadcast %90 : vector<1x8x1xf32> to vector<1x8x32xf32>
    %99 = arith.subf %86, %98 : vector<1x8x32xf32>
    %cst_29 = arith.constant 9.99999974E-6 : f32
    %100 = vector.broadcast %cst_29 : f32 to vector<1x8x1xf32>
    %101 = arith.addf %97, %100 : vector<1x8x1xf32>
    %102 = math.rsqrt %101 : vector<1x8x1xf32>
    %103 = vector.broadcast %102 : vector<1x8x1xf32> to vector<1x8x32xf32>
    %104 = arith.mulf %99, %103 : vector<1x8x32xf32>
    %105 = vector.broadcast %78 : vector<1x1x32xf32> to vector<1x8x32xf32>
    %106 = arith.mulf %104, %105 : vector<1x8x32xf32>
    %107 = vector.broadcast %81 : vector<1x1x32xf32> to vector<1x8x32xf32>
    %108 = arith.addf %106, %107 : vector<1x8x32xf32>
    %109 = arith.addf %75, %85 : vector<1x8x32xf32>
    %cst_30 = arith.constant dense<0.000000e+00> : vector<1x8xf32>
    %110 = vector.multi_reduction <add>, %109, %cst_30 [2] : vector<1x8x32xf32> to vector<1x8xf32>
    %111 = vector.shape_cast %110 : vector<1x8xf32> to vector<1x8x1xf32>
    %cst_31 = arith.constant 3.200000e+01 : f32
    %112 = vector.broadcast %cst_31 : f32 to vector<1x8x1xf32>
    %113 = arith.divf %111, %112 : vector<1x8x1xf32>
    %114 = vector.broadcast %113 : vector<1x8x1xf32> to vector<1x8x32xf32>
    %115 = arith.subf %109, %114 : vector<1x8x32xf32>
    %116 = arith.mulf %115, %115 : vector<1x8x32xf32>
    %cst_32 = arith.constant dense<0.000000e+00> : vector<1x8xf32>
    %117 = vector.multi_reduction <add>, %116, %cst_32 [2] : vector<1x8x32xf32> to vector<1x8xf32>
    %118 = vector.shape_cast %117 : vector<1x8xf32> to vector<1x8x1xf32>
    %cst_33 = arith.constant 3.200000e+01 : f32
    %119 = vector.broadcast %cst_33 : f32 to vector<1x8x1xf32>
    %120 = arith.divf %118, %119 : vector<1x8x1xf32>
    %121 = vector.broadcast %113 : vector<1x8x1xf32> to vector<1x8x32xf32>
    %122 = arith.subf %109, %121 : vector<1x8x32xf32>
    %cst_34 = arith.constant 9.99999974E-6 : f32
    %123 = vector.broadcast %cst_34 : f32 to vector<1x8x1xf32>
    %124 = arith.addf %120, %123 : vector<1x8x1xf32>
    %125 = math.rsqrt %124 : vector<1x8x1xf32>
    %126 = vector.broadcast %125 : vector<1x8x1xf32> to vector<1x8x32xf32>
    %127 = arith.mulf %122, %126 : vector<1x8x32xf32>
    %128 = vector.broadcast %78 : vector<1x1x32xf32> to vector<1x8x32xf32>
    %129 = arith.mulf %127, %128 : vector<1x8x32xf32>
    %130 = vector.broadcast %81 : vector<1x1x32xf32> to vector<1x8x32xf32>
    %131 = arith.addf %129, %130 : vector<1x8x32xf32>
    %c19 = arith.constant 19 : index
    %c0_35 = arith.constant 0 : index
    %132 = vector.load %arg4[%c19, %c0_35] : memref<32x32xf32, #tpu.memory_space<vmem>>, vector<1x32xf32>
    %133 = vector.shape_cast %132 : vector<1x32xf32> to vector<32xf32>
    %134 = vector.shape_cast %133 : vector<32xf32> to vector<1x1x32xf32>
    %c0_36 = arith.constant 0 : index
    %c0_37 = arith.constant 0 : index
    %c0_38 = arith.constant 0 : index
    %135 = vector.load %arg5[%c0_36, %c0_37, %c0_38] : memref<1x17x32xf32, #tpu.memory_space<vmem>>, vector<1x1x32xf32>
    tpu.vector_store %arg5[%c0_36, %c0_37, %c0_38], %134 {strides = array<i32>} : memref<1x17x32xf32, #tpu.memory_space<vmem>>, vector<1x1x32xf32>,
    %136 = vector.extract_strided_slice %108 {offsets = [0, 0, 0], sizes = [1, 1, 32], strides = [1, 1, 1]} : vector<1x8x32xf32> to vector<1x1x32xf32>
    %137 = vector.extract_strided_slice %131 {offsets = [0, 0, 0], sizes = [1, 1, 32], strides = [1, 1, 1]} : vector<1x8x32xf32> to vector<1x1x32xf32>
    %138 = tpu.concatenate %136, %137 in 1 : vector<1x1x32xf32>, vector<1x1x32xf32> -> vector<1x2x32xf32>
    %c0_39 = arith.constant 0 : index
    %c1 = arith.constant 1 : index
    %c0_40 = arith.constant 0 : index
    %139 = vector.load %arg5[%c0_39, %c1, %c0_40] : memref<1x17x32xf32, #tpu.memory_space<vmem>>, vector<1x2x32xf32>
    tpu.vector_store %arg5[%c0_39, %c1, %c0_40], %138 {strides = array<i32>} : memref<1x17x32xf32, #tpu.memory_space<vmem>>, vector<1x2x32xf32>,
    %140 = vector.extract_strided_slice %108 {offsets = [0, 1, 0], sizes = [1, 1, 32], strides = [1, 1, 1]} : vector<1x8x32xf32> to vector<1x1x32xf32>
    %141 = vector.extract_strided_slice %131 {offsets = [0, 1, 0], sizes = [1, 1, 32], strides = [1, 1, 1]} : vector<1x8x32xf32> to vector<1x1x32xf32>
    %142 = tpu.concatenate %140, %141 in 1 : vector<1x1x32xf32>, vector<1x1x32xf32> -> vector<1x2x32xf32>
    %c0_41 = arith.constant 0 : index
    %c3 = arith.constant 3 : index
    %c0_42 = arith.constant 0 : index
    %143 = vector.load %arg5[%c0_41, %c3, %c0_42] : memref<1x17x32xf32, #tpu.memory_space<vmem>>, vector<1x2x32xf32>
    tpu.vector_store %arg5[%c0_41, %c3, %c0_42], %142 {strides = array<i32>} : memref<1x17x32xf32, #tpu.memory_space<vmem>>, vector<1x2x32xf32>,
    %144 = vector.extract_strided_slice %108 {offsets = [0, 2, 0], sizes = [1, 1, 32], strides = [1, 1, 1]} : vector<1x8x32xf32> to vector<1x1x32xf32>
    %145 = vector.extract_strided_slice %131 {offsets = [0, 2, 0], sizes = [1, 1, 32], strides = [1, 1, 1]} : vector<1x8x32xf32> to vector<1x1x32xf32>
    %146 = tpu.concatenate %144, %145 in 1 : vector<1x1x32xf32>, vector<1x1x32xf32> -> vector<1x2x32xf32>
    %c0_43 = arith.constant 0 : index
    %c5 = arith.constant 5 : index
    %c0_44 = arith.constant 0 : index
    %147 = vector.load %arg5[%c0_43, %c5, %c0_44] : memref<1x17x32xf32, #tpu.memory_space<vmem>>, vector<1x2x32xf32>
    tpu.vector_store %arg5[%c0_43, %c5, %c0_44], %146 {strides = array<i32>} : memref<1x17x32xf32, #tpu.memory_space<vmem>>, vector<1x2x32xf32>,
    %148 = vector.extract_strided_slice %108 {offsets = [0, 3, 0], sizes = [1, 1, 32], strides = [1, 1, 1]} : vector<1x8x32xf32> to vector<1x1x32xf32>
    %149 = vector.extract_strided_slice %131 {offsets = [0, 3, 0], sizes = [1, 1, 32], strides = [1, 1, 1]} : vector<1x8x32xf32> to vector<1x1x32xf32>
    %150 = tpu.concatenate %148, %149 in 1 : vector<1x1x32xf32>, vector<1x1x32xf32> -> vector<1x2x32xf32>
    %c0_45 = arith.constant 0 : index
    %c7 = arith.constant 7 : index
    %c0_46 = arith.constant 0 : index
    %151 = vector.load %arg5[%c0_45, %c7, %c0_46] : memref<1x17x32xf32, #tpu.memory_space<vmem>>, vector<1x2x32xf32>
    tpu.vector_store %arg5[%c0_45, %c7, %c0_46], %150 {strides = array<i32>} : memref<1x17x32xf32, #tpu.memory_space<vmem>>, vector<1x2x32xf32>,
    %152 = vector.extract_strided_slice %108 {offsets = [0, 4, 0], sizes = [1, 1, 32], strides = [1, 1, 1]} : vector<1x8x32xf32> to vector<1x1x32xf32>
    %153 = vector.extract_strided_slice %131 {offsets = [0, 4, 0], sizes = [1, 1, 32], strides = [1, 1, 1]} : vector<1x8x32xf32> to vector<1x1x32xf32>
    %154 = tpu.concatenate %152, %153 in 1 : vector<1x1x32xf32>, vector<1x1x32xf32> -> vector<1x2x32xf32>
    %c0_47 = arith.constant 0 : index
    %c9 = arith.constant 9 : index
    %c0_48 = arith.constant 0 : index
    %155 = vector.load %arg5[%c0_47, %c9, %c0_48] : memref<1x17x32xf32, #tpu.memory_space<vmem>>, vector<1x2x32xf32>
    tpu.vector_store %arg5[%c0_47, %c9, %c0_48], %154 {strides = array<i32>} : memref<1x17x32xf32, #tpu.memory_space<vmem>>, vector<1x2x32xf32>,
    %156 = vector.extract_strided_slice %108 {offsets = [0, 5, 0], sizes = [1, 1, 32], strides = [1, 1, 1]} : vector<1x8x32xf32> to vector<1x1x32xf32>
    %157 = vector.extract_strided_slice %131 {offsets = [0, 5, 0], sizes = [1, 1, 32], strides = [1, 1, 1]} : vector<1x8x32xf32> to vector<1x1x32xf32>
    %158 = tpu.concatenate %156, %157 in 1 : vector<1x1x32xf32>, vector<1x1x32xf32> -> vector<1x2x32xf32>
    %c0_49 = arith.constant 0 : index
    %c11 = arith.constant 11 : index
    %c0_50 = arith.constant 0 : index
    %159 = vector.load %arg5[%c0_49, %c11, %c0_50] : memref<1x17x32xf32, #tpu.memory_space<vmem>>, vector<1x2x32xf32>
    tpu.vector_store %arg5[%c0_49, %c11, %c0_50], %158 {strides = array<i32>} : memref<1x17x32xf32, #tpu.memory_space<vmem>>, vector<1x2x32xf32>,
    %160 = vector.extract_strided_slice %108 {offsets = [0, 6, 0], sizes = [1, 1, 32], strides = [1, 1, 1]} : vector<1x8x32xf32> to vector<1x1x32xf32>
    %161 = vector.extract_strided_slice %131 {offsets = [0, 6, 0], sizes = [1, 1, 32], strides = [1, 1, 1]} : vector<1x8x32xf32> to vector<1x1x32xf32>
    %162 = tpu.concatenate %160, %161 in 1 : vector<1x1x32xf32>, vector<1x1x32xf32> -> vector<1x2x32xf32>
    %c0_51 = arith.constant 0 : index
    %c13 = arith.constant 13 : index
    %c0_52 = arith.constant 0 : index
    %163 = vector.load %arg5[%c0_51, %c13, %c0_52] : memref<1x17x32xf32, #tpu.memory_space<vmem>>, vector<1x2x32xf32>
    tpu.vector_store %arg5[%c0_51, %c13, %c0_52], %162 {strides = array<i32>} : memref<1x17x32xf32, #tpu.memory_space<vmem>>, vector<1x2x32xf32>,
    %164 = vector.extract_strided_slice %108 {offsets = [0, 7, 0], sizes = [1, 1, 32], strides = [1, 1, 1]} : vector<1x8x32xf32> to vector<1x1x32xf32>
    %165 = vector.extract_strided_slice %131 {offsets = [0, 7, 0], sizes = [1, 1, 32], strides = [1, 1, 1]} : vector<1x8x32xf32> to vector<1x1x32xf32>
    %166 = tpu.concatenate %164, %165 in 1 : vector<1x1x32xf32>, vector<1x1x32xf32> -> vector<1x2x32xf32>
    %c0_53 = arith.constant 0 : index
    %c15 = arith.constant 15 : index
    %c0_54 = arith.constant 0 : index
    %167 = vector.load %arg5[%c0_53, %c15, %c0_54] : memref<1x17x32xf32, #tpu.memory_space<vmem>>, vector<1x2x32xf32>
    tpu.vector_store %arg5[%c0_53, %c15, %c0_54], %166 {strides = array<i32>} : memref<1x17x32xf32, #tpu.memory_space<vmem>>, vector<1x2x32xf32>,
    return
  }
  func.func @transform_0(%arg0: i32) -> (i32, i32) {
    %c0_i32 = arith.constant 0 : i32
    %c0_i32_0 = arith.constant 0 : i32
    return %arg0, %c0_i32 : i32, i32
  }
  func.func @transform_1(%arg0: i32) -> (i32, i32) {
    %c0_i32 = arith.constant 0 : i32
    %c0_i32_0 = arith.constant 0 : i32
    return %arg0, %c0_i32 : i32, i32
  }
  func.func @transform_2(%arg0: i32) -> (i32, i32) {
    %c0_i32 = arith.constant 0 : i32
    %c0_i32_0 = arith.constant 0 : i32
    %c0_i32_1 = arith.constant 0 : i32
    return %c0_i32, %c0_i32_0 : i32, i32
  }
  func.func @transform_3(%arg0: i32) -> (i32, i32) {
    %c0_i32 = arith.constant 0 : i32
    %c0_i32_0 = arith.constant 0 : i32
    %c0_i32_1 = arith.constant 0 : i32
    return %c0_i32, %c0_i32_0 : i32, i32
  }
  func.func @transform_4(%arg0: i32) -> (i32, i32, i32) {
    %c0_i32 = arith.constant 0 : i32
    %c0_i32_0 = arith.constant 0 : i32
    %c0_i32_1 = arith.constant 0 : i32
    return %arg0, %c0_i32, %c0_i32_0 : i32, i32, i32
  }
}

</mosaic_0001>

<llo_original>
// kernel: tpu_custom_call.1
$region0: #{tpu_custom_call.1}
  #allocation0 [shape = 'u32[]', space=smem, size = 0x4, offset = 0x4, fixed_abs, tag = 'smem constant byte address 0x4 - core index']
  #allocation1 [shape = 'u32[144,128]{1,0:T(1,128)}', space=vmem, size = 0x12000, scoped, tag = 'internal scratch']
  %s0 = inlined_call_operand.vmem [shape: f32[16,64], index: 0, kind: input, shape index: {}]
  %s1 = inlined_call_operand.vmem [shape: s32[16,1], index: 1, kind: input, shape index: {}]
  %s2 = inlined_call_operand.vmem [shape: f32[64,32], index: 2, kind: input, shape index: {}]
  %s3 = inlined_call_operand.vmem [shape: f32[32,32], index: 3, kind: input, shape index: {}]
  %s4 = inlined_call_operand.vmem [shape: f32[2,17,32], index: 4, kind: output, shape index: {}]
  %s5 = sld [smem:[#allocation0]]
  $region49: #{tpu_custom_call.1} parent=0
    _
  %s7 = ssub.s32 1, %s5
  %s8 = scalar_select 0, %s7, %s5
  loop: start=0, step=1, limit=4
  $region2: #{tpu_custom_call.1} parent=0 // loop_pre_header
    _
  $region3: #{tpu_custom_call.1} parent=0 // loop_header
    %s10 = sphi 0, %s14
    %p11 = scmp.ge.s32.totalorder %s10, 4
    %s20 = sphi 0, %s22
    %s23 = sphi 0, %s20
    %s24 = sphi 0, %s23
    %s40 = sphi 0, %s24
    %s46 = sphi 0, %s48
    %s49 = sphi 0, %s46
    %s50 = sphi 0, %s49
    %s66 = sphi 0, %s50
    %s70 = sphi 0, %s70
    %s72 = sphi 0, %s70
    %s73 = sphi 0, %s72
    %s87 = sphi 0, %s73
    %s91 = sphi 0, %s91
    %s93 = sphi 0, %s91
    %s94 = sphi 0, %s93
    %s108 = sphi 0, %s94
    %s114 = sphi 0, %s116
    %s117 = sphi 0, %s114
    %s118 = sphi 0, %s117
    %s134 = sphi 0, %s118
  $region4: #{tpu_custom_call.1} parent=0 // loop_header_branch
    %13 = sbr.rel (%p11) target = $region8
  $region5: #{tpu_custom_call.1} parent=0 // loop_body
    %s15 = ssub.s32 %s10, 1
    %s16 = ssub.s32 %s10, 2
    %s17 = sadd.s32 %s10, 1
    %s18 = ssub.s32 %s10, %s17
    %p19 = scmp.eq.s32.totalorder %s18, 0
    %s21 = sadd.s32 %s20, 1
    %s22 = scalar_select %p19, %s20, %s21
    %p25 = pneg %p19
    %p26 = scmp.eq.s32.totalorder %s10, 1
    %p27 = por %p25, %p26
    %p28 = scmp.ne.s32.totalorder %s20, %s23
    %p29 = scmp.eq.s32.totalorder %s10, 0
    %p30 = por %p28, %p29
    %p31 = scmp.ne.s32.totalorder %s20, %s23
    %p32 = scmp.eq.s32.totalorder %s15, 1
    %p33 = por %p31, %p32
    %p34 = scmp.ne.s32.totalorder %s23, %s24
    %p35 = scmp.eq.s32.totalorder %s15, 0
    %p36 = por %p34, %p35
    %p37 = scmp.ne.s32.totalorder %s23, %s24
    %p38 = scmp.eq.s32.totalorder %s16, 1
    %p39 = por %p37, %p38
    %p41 = scmp.ne.s32.totalorder %s24, %s40
    %p42 = scmp.eq.s32.totalorder %s16, 0
    %p43 = por %p41, %p42
    %s44 = ssub.s32 %s10, %s17
    %p45 = scmp.eq.s32.totalorder %s44, 0
    %s47 = sadd.s32 %s46, 1
    %s48 = scalar_select %p45, %s46, %s47
    %p51 = pneg %p45
    %p52 = scmp.eq.s32.totalorder %s10, 1
    %p53 = por %p51, %p52
    %p54 = scmp.ne.s32.totalorder %s46, %s49
    %p55 = scmp.eq.s32.totalorder %s10, 0
    %p56 = por %p54, %p55
    %p57 = scmp.ne.s32.totalorder %s46, %s49
    %p58 = scmp.eq.s32.totalorder %s15, 1
    %p59 = por %p57, %p58
    %p60 = scmp.ne.s32.totalorder %s49, %s50
    %p61 = scmp.eq.s32.totalorder %s15, 0
    %p62 = por %p60, %p61
    %p63 = scmp.ne.s32.totalorder %s49, %s50
    %p64 = scmp.eq.s32.totalorder %s16, 1
    %p65 = por %p63, %p64
    %p67 = scmp.ne.s32.totalorder %s50, %s66
    %p68 = scmp.eq.s32.totalorder %s16, 0
    %p69 = por %p67, %p68
    %s71 = sadd.s32 %s70, 1
    %p74 = scmp.eq.s32.totalorder %s10, 1
    %p75 = scmp.ne.s32.totalorder %s70, %s72
    %p76 = scmp.eq.s32.totalorder %s10, 0
    %p77 = por %p75, %p76
    %p78 = scmp.ne.s32.totalorder %s70, %s72
    %p79 = scmp.eq.s32.totalorder %s15, 1
    %p80 = por %p78, %p79
    %p81 = scmp.ne.s32.totalorder %s72, %s73
    %p82 = scmp.eq.s32.totalorder %s15, 0
    %p83 = por %p81, %p82
    %p84 = scmp.ne.s32.totalorder %s72, %s73
    %p85 = scmp.eq.s32.totalorder %s16, 1
    %p86 = por %p84, %p85
    %p88 = scmp.ne.s32.totalorder %s73, %s87
    %p89 = scmp.eq.s32.totalorder %s16, 0
    %p90 = por %p88, %p89
    %s92 = sadd.s32 %s91, 1
    %p95 = scmp.eq.s32.totalorder %s10, 1
    %p96 = scmp.ne.s32.totalorder %s91, %s93
    %p97 = scmp.eq.s32.totalorder %s10, 0
    %p98 = por %p96, %p97
    %p99 = scmp.ne.s32.totalorder %s91, %s93
    %p100 = scmp.eq.s32.totalorder %s15, 1
    %p101 = por %p99, %p100
    %p102 = scmp.ne.s32.totalorder %s93, %s94
    %p103 = scmp.eq.s32.totalorder %s15, 0
    %p104 = por %p102, %p103
    %p105 = scmp.ne.s32.totalorder %s93, %s94
    %p106 = scmp.eq.s32.totalorder %s16, 1
    %p107 = por %p105, %p106
    %p109 = scmp.ne.s32.totalorder %s94, %s108
    %p110 = scmp.eq.s32.totalorder %s16, 0
    %p111 = por %p109, %p110
    %s112 = ssub.s32 %s10, %s17
    %p113 = scmp.eq.s32.totalorder %s112, 0
    %s115 = sadd.s32 %s114, 1
    %s116 = scalar_select %p113, %s114, %s115
    %p119 = pneg %p113
    %p120 = scmp.eq.s32.totalorder %s10, 1
    %p121 = por %p119, %p120
    %p122 = scmp.ne.s32.totalorder %s114, %s117
    %p123 = scmp.eq.s32.totalorder %s10, 0
    %p124 = por %p122, %p123
    %p125 = scmp.ne.s32.totalorder %s114, %s117
    %p126 = scmp.eq.s32.totalorder %s15, 1
    %p127 = por %p125, %p126
    %p128 = scmp.ne.s32.totalorder %s117, %s118
    %p129 = scmp.eq.s32.totalorder %s15, 0
    %p130 = por %p128, %p129
    %p131 = scmp.ne.s32.totalorder %s117, %s118
    %p132 = scmp.eq.s32.totalorder %s16, 1
    %p133 = por %p131, %p132
    %p135 = scmp.ne.s32.totalorder %s118, %s134
    %p136 = scmp.eq.s32.totalorder %s16, 0
    %p137 = por %p135, %p136
    %p138 = scmp.le.s32.totalorder 1, %s10
    %p139 = scmp.lt.s32.totalorder %s10, 3
    %p140 = pnand %p138, %p139
    %p141 = pneg %p140
    // Predicated region
    $region9: #{tpu_custom_call.1} parent=5 // pred_check
      _
    $region10: #{tpu_custom_call.1} parent=5 // pred_check_branch
      %143 = sbr.rel (%p140) target = $region12
    $region11: #{tpu_custom_call.1} parent=5 // pred_region
      %s144 = ssub.s32 %s10, 1
      // Predicated region
      $region13: #{tpu_custom_call.1} parent=11 // pred_check
        %p145 = pneg %p83
      $region14: #{tpu_custom_call.1} parent=11 // pred_check_branch
        %147 = sbr.rel (%p145) target = $region16
      $region15: #{tpu_custom_call.1} parent=11 // pred_region
        _
      $region16: #{tpu_custom_call.1} parent=11 // pred_fallthru
        _
      // Predicated region
      $region17: #{tpu_custom_call.1} parent=11 // pred_check
        %p148 = pneg %p104
      $region18: #{tpu_custom_call.1} parent=11 // pred_check_branch
        %150 = sbr.rel (%p148) target = $region20
      $region19: #{tpu_custom_call.1} parent=11 // pred_region
        _
      $region20: #{tpu_custom_call.1} parent=11 // pred_fallthru
        _
    $region12: #{tpu_custom_call.1} parent=5 // pred_fallthru
      _
    %p151 = scmp.lt.s32.totalorder %s10, 2
    // Predicated region
    $region21: #{tpu_custom_call.1} parent=5 // pred_check
      %p152 = pneg %p151
    $region22: #{tpu_custom_call.1} parent=5 // pred_check_branch
      %154 = sbr.rel (%p152) target = $region24
    $region23: #{tpu_custom_call.1} parent=5 // pred_region
      // Predicated region
      $region25: #{tpu_custom_call.1} parent=23 // pred_check
        %p155 = pneg %p30
      $region26: #{tpu_custom_call.1} parent=23 // pred_check_branch
        %157 = sbr.rel (%p155) target = $region28
      $region27: #{tpu_custom_call.1} parent=23 // pred_region
        %p158 = scmp.lt.s32.totalorder %s10, 1
        %s159 = scalar_select %p158, %s10, 1
        %s160 = smul.addr %s159, 8
        %s161 = scalar_lea.vmem %s0, %s160
      $region28: #{tpu_custom_call.1} parent=23 // pred_fallthru
        _
      // Predicated region
      $region29: #{tpu_custom_call.1} parent=23 // pred_check
        %p162 = pneg %p56
      $region30: #{tpu_custom_call.1} parent=23 // pred_check_branch
        %164 = sbr.rel (%p162) target = $region32
      $region31: #{tpu_custom_call.1} parent=23 // pred_region
        %p165 = scmp.lt.s32.totalorder %s10, 1
        %s166 = scalar_select %p165, %s10, 1
        %s167 = smul.addr %s166, 8
        %s168 = scalar_lea.vmem %s1, %s167
      $region32: #{tpu_custom_call.1} parent=23 // pred_fallthru
        _
    $region24: #{tpu_custom_call.1} parent=5 // pred_fallthru
      _
    %p169 = scmp.le.s32.totalorder 1, %s10
    %p170 = scmp.lt.s32.totalorder %s10, 3
    %p171 = pnand %p169, %p170
    %p172 = pneg %p171
    // Predicated region
    $region33: #{tpu_custom_call.1} parent=5 // pred_check
      _
    $region34: #{tpu_custom_call.1} parent=5 // pred_check_branch
      %174 = sbr.rel (%p171) target = $region36
    $region35: #{tpu_custom_call.1} parent=5 // pred_region
      %s175 = ssub.s32 %s10, 1
      %p176 = scmp.lt.s32.totalorder %s15, 1
      %s177 = scalar_select %p176, %s15, 1
      %s178 = smul.addr %s177, 8
      %s179 = scalar_lea.vmem %s0, %s178
      %p180 = pneg %p36
      %p181 = pneg %p33
      %p182 = scmp.lt.s32.totalorder %s15, 1
      %s183 = scalar_select %p182, %s15, 1
      %s184 = smul.addr %s183, 8
      %s185 = scalar_lea.vmem %s1, %s184
      %p186 = pneg %p62
      %p187 = pneg %p59
      %p188 = pneg %p83
      %p189 = pneg %p80
      %p190 = pneg %p104
      %p191 = pneg %p101
      %p192 = pneg %p130
      %p193 = pneg %p127
      %p194 = scmp.lt.s32.totalorder %s15, 1
      %s195 = scalar_select %p194, %s15, 1
      %s196 = smul.addr %s195, 3
      %s197 = smul.addr %s196, 8
      %s198 = scalar_lea.vmem %s4, %s197
      %p199 = scmp.lt.s32.totalorder %s15, 1
      %s200 = scalar_select %p199, %s15, 1
      %s201 = smul.addr %s200, 8
      %s202 = scalar_lea.vmem %s0, %s201
      %p203 = scmp.lt.s32.totalorder %s15, 1
      %s204 = scalar_select %p203, %s15, 1
      %s205 = smul.addr %s204, 8
      %s206 = scalar_lea.vmem %s1, %s205
      %p207 = scmp.lt.s32.totalorder %s15, 1
      %s208 = scalar_select %p207, %s15, 1
      %s209 = smul.addr %s208, 3
      %s210 = smul.addr %s209, 8
      %s211 = scalar_lea.vmem %s4, %s210
      %v212 = vld [vmem:[%s202] sm:$0xff]
      %v213 = vld [vmem:[%s2] sm:$0xff]
      %v214 = vld [vmem:[%s2 + $0x8] sm:$0xff]
      %v215 = vld [vmem:[%s2 + $0x10] sm:$0xff]
      %v216 = vld [vmem:[%s2 + $0x18] sm:$0xff]
      %v217 = vld [vmem:[%s2 + $0x20] sm:$0xff]
      %v218 = vld [vmem:[%s2 + $0x28] sm:$0xff]
      %v219 = vld [vmem:[%s2 + $0x30] sm:$0xff]
      %v220 = vld [vmem:[%s2 + $0x38] sm:$0xff]
      %vm221 = vcmask 523264
      %v223 = vsel %vm221, %v212, 0
      %225 = vmatprep.subr.mxu0 0.0
      %226 = vmatpush1.msra.mxu0 0.0
      %227 = vmatprep.subr.mxu0 0.0
      %228 = vmatpush1.msra.mxu0 0.0
      %229 = vmatprep.subr.mxu0 0.0
      %230 = vmatpush1.msra.mxu0 0.0
      %231 = vmatprep.subr.mxu0 0.0
      %232 = vmatpush1.msra.mxu0 0.0
      %233 = vmatprep.subr.mxu0 0.0
      %234 = vmatpush1.msra.mxu0 0.0
      %235 = vmatprep.subr.mxu0 0.0
      %236 = vmatpush1.msra.mxu0 0.0
      %237 = vmatprep.subr.mxu0 0.0
      %238 = vmatpush1.msra.mxu0 0.0
      %239 = vmatprep.subr.mxu0 0.0
      %240 = vmatpush1.msra.mxu0 0.0
      %241 = vmatprep.subr.mxu0 0.0
      %242 = vmatpush1.msra.mxu0 %v220
      %243 = vmatprep.subr.mxu0 0.0
      %244 = vmatpush1.msra.mxu0 %v219
      %245 = vmatprep.subr.mxu0 0.0
      %246 = vmatpush1.msra.mxu0 %v218
      %247 = vmatprep.subr.mxu0 0.0
      %248 = vmatpush1.msra.mxu0 %v217
      %249 = vmatprep.subr.mxu0 0.0
      %250 = vmatpush1.msra.mxu0 %v216
      %251 = vmatprep.subr.mxu0 0.0
      %252 = vmatpush1.msra.mxu0 %v215
      %253 = vmatprep.subr.mxu0 0.0
      %254 = vmatpush1.msra.mxu0 %v214
      %255 = vmatprep.subr.mxu0 0.0
      %256 = vmatpush1.msra.mxu0 %v213
      %257 = vmatprep.subr.mxu0 0.0
      %258 = vmatpush2.msra.mxu0 0.0
      %259 = vmatprep.subr.mxu0 0.0
      %260 = vmatpush2.msra.mxu0 0.0
      %261 = vmatprep.subr.mxu0 0.0
      %262 = vmatpush2.msra.mxu0 0.0
      %263 = vmatprep.subr.mxu0 0.0
      %264 = vmatpush2.msra.mxu0 0.0
      %265 = vmatprep.subr.mxu0 0.0
      %266 = vmatpush2.msra.mxu0 0.0
      %267 = vmatprep.subr.mxu0 0.0
      %268 = vmatpush2.msra.mxu0 0.0
      %269 = vmatprep.subr.mxu0 0.0
      %270 = vmatpush2.msra.mxu0 0.0
      %271 = vmatprep.subr.mxu0 0.0
      %272 = vmatpush2.msra.mxu0 0.0
      %273 = vmatprep.subr.mxu0 0.0
      %274 = vmatpush2.msra.mxu0 0.0
      %275 = vmatprep.subr.mxu0 0.0
      %276 = vmatpush2.msra.mxu0 0.0
      %277 = vmatprep.subr.mxu0 0.0
      %278 = vmatpush2.msra.mxu0 0.0
      %279 = vmatprep.subr.mxu0 0.0
      %280 = vmatpush2.msra.mxu0 0.0
      %281 = vmatprep.subr.mxu0 0.0
      %282 = vmatpush2.msra.mxu0 0.0
      %283 = vmatprep.subr.mxu0 0.0
      %284 = vmatpush2.msra.mxu0 0.0
      %285 = vmatprep.subr.mxu0 0.0
      %286 = vmatpush2.msra.mxu0 0.0
      %287 = vmatprep.subr.mxu0 0.0
      %288 = vmatpush2.msra.mxu0 0.0
      %289 = vmatprep.mubr.f32.mxu0 0.0
      %290 = vmatmul.mubr.f32.gmra.mxu0 %v223
      %v291 = vpop.f32.mrf.mxu0
      %v292 = vadd.f32 0.0, %v291
      %v293 = vpop.f32.mrf.mxu0
      %294 = vdwg.mxu0
      %v295 = vld [vmem:[%s3 + $0x10] sm:$0x1]
      %v296 = vlaneseq
      %v297 = vshrl.u32 %v296, 7
      %v298 = vsub.s32 0, %v297
      %v299 = vrot.slane %v295, %v298
      %v300 = vadd.f32 %v292, %v299
      %v301 = vmax.f32 %v300, 0.0
      %v302 = vld [vmem:[%s206] sm:$0xff]
      %303 = vset.pattern.permute.xlu0 0
      %304 = vperm.xlu0 %303, %v302
      %v305 = vpop.permute.xlu0 %304
      %v306 = vld [vmem:[%s3 + $0x14] sm:$0x1]
      %vm307 = vcmp.eq.s32.totalorder %v305, 0
      %v308 = vlaneseq
      %v309 = vshrl.u32 %v308, 7
      %v310 = vsub.s32 0, %v309
      %v311 = vrot.slane %v306, %v310
      %v312 = vsel %vm307, %v311, 0.0
      %v313 = vadd.f32 %v312, 0.0
      %v314 = vld [vmem:[%s3 + $0x15] sm:$0x1]
      %vm315 = vcmp.eq.s32.totalorder %v305, 1
      %v316 = vlaneseq
      %v317 = vshrl.u32 %v316, 7
      %v318 = vsub.s32 0, %v317
      %v319 = vrot.slane %v314, %v318
      %v320 = vsel %vm315, %v319, 0.0
      %v321 = vadd.f32 %v313, %v320
      %v322 = vld [vmem:[%s3 + $0x16] sm:$0x1]
      %vm323 = vcmp.eq.s32.totalorder %v305, 2
      %v324 = vlaneseq
      %v325 = vshrl.u32 %v324, 7
      %v326 = vsub.s32 0, %v325
      %v327 = vrot.slane %v322, %v326
      %v328 = vsel %vm323, %v327, 0.0
      %v329 = vadd.f32 %v321, %v328
      %v330 = vld [vmem:[%s3 + $0x17] sm:$0x1]
      %vm331 = vcmp.eq.s32.totalorder %v305, 3
      %v332 = vlaneseq
      %v333 = vshrl.u32 %v332, 7
      %v334 = vsub.s32 0, %v333
      %v335 = vrot.slane %v330, %v334
      %v336 = vsel %vm331, %v335, 0.0
      %v337 = vadd.f32 %v329, %v336
      %v338 = vld [vmem:[%s3 + $0x18] sm:$0x1]
      %vm339 = vcmp.eq.s32.totalorder %v305, 4
      %v340 = vlaneseq
      %v341 = vshrl.u32 %v340, 7
      %v342 = vsub.s32 0, %v341
      %v343 = vrot.slane %v338, %v342
      %v344 = vsel %vm339, %v343, 0.0
      %v345 = vadd.f32 %v337, %v344
      %v346 = vld [vmem:[%s3 + $0x19] sm:$0x1]
      %vm347 = vcmp.eq.s32.totalorder %v305, 5
      %v348 = vlaneseq
      %v349 = vshrl.u32 %v348, 7
      %v350 = vsub.s32 0, %v349
      %v351 = vrot.slane %v346, %v350
      %v352 = vsel %vm347, %v351, 0.0
      %v353 = vadd.f32 %v345, %v352
      %v354 = vld [vmem:[%s3 + $0x11] sm:$0x1]
      %v355 = vld [vmem:[%s3 + $0x12] sm:$0x1]
      %v356 = vld [vmem:[%s3] sm:$0xff]
      %v357 = vld [vmem:[%s3 + $0x8] sm:$0xff]
      %v358 = vadd.f32 %v301, %v356
      %vm359 = vcmask 261120
      %v360 = vsel %vm359, %v358, 0.0
      %361 = vadd.xlane.f32.xlu0 %v360
      %v362 = vpop.xlane.xlu0 %361
      %v363 = vrcp.pop 32.0
      %v364 = vmul.f32 %v362, %v363
      %v365 = vsub.f32 %v358, %v364
      %v366 = vmul.f32 %v365, %v365
      %v367 = vsel %vm359, %v366, 0.0
      %368 = vadd.xlane.f32.xlu0 %v367
      %v369 = vpop.xlane.xlu0 %368
      %v370 = vmul.f32 %v369, %v363
      %v371 = vadd.f32 %v370, 1e-05
      %v372 = vrsqrt.pop %v371
      %v373 = vmul.f32 %v365, %v372
      %v374 = vlaneseq
      %v375 = vshrl.u32 %v374, 7
      %v376 = vsub.s32 0, %v375
      %v377 = vrot.slane %v354, %v376
      %v378 = vmul.f32 %v373, %v377
      %v379 = vlaneseq
      %v380 = vshrl.u32 %v379, 7
      %v381 = vsub.s32 0, %v380
      %v382 = vrot.slane %v355, %v381
      %v383 = vadd.f32 %v378, %v382
      %v384 = vadd.f32 %v353, %v357
      %v385 = vsel %vm359, %v384, 0.0
      %386 = vadd.xlane.f32.xlu0 %v385
      %v387 = vpop.xlane.xlu0 %386
      %v388 = vmul.f32 %v387, %v363
      %v389 = vsub.f32 %v384, %v388
      %v390 = vmul.f32 %v389, %v389
      %v391 = vsel %vm359, %v390, 0.0
      %392 = vadd.xlane.f32.xlu0 %v391
      %v393 = vpop.xlane.xlu0 %392
      %v394 = vmul.f32 %v393, %v363
      %v395 = vadd.f32 %v394, 1e-05
      %v396 = vrsqrt.pop %v395
      %v397 = vmul.f32 %v389, %v396
      %v398 = vmul.f32 %v397, %v377
      %v399 = vadd.f32 %v398, %v382
      %v400 = vld [vmem:[%s3 + $0x13] sm:$0x1]
      %vm401 = vcmask 253952
      %402 = vst.msk [vmem:[%s211] sm:$0x1] %vm401, %v400
      %v404 = vrot.slane %v399, 7
      %vm406 = vcmask 1040384
      %v407 = vsel %vm406, %v383, %v404
      %vm408 = vcmask 254976
      %409 = vst.msk [vmem:[%s211 + $0x1] sm:$0x3] %vm408, %v407
      %v411 = vrot.slane %v383, 1
      %v413 = vsel %vm406, %v411, %v399
      %414 = vst.msk [vmem:[%s211 + $0x3] sm:$0x3] %vm408, %v413
      %v415 = vrot.slane %v383, 2
      %v417 = vrot.slane %v399, 1
      %v419 = vsel %vm406, %v415, %v417
      %420 = vst.msk [vmem:[%s211 + $0x5] sm:$0x3] %vm408, %v419
      %v421 = vrot.slane %v383, 3
      %v423 = vrot.slane %v399, 2
      %v425 = vsel %vm406, %v421, %v423
      %426 = vst.msk [vmem:[%s211 + $0x7] sm:$0x3] %vm408, %v425
      %v427 = vrot.slane %v383, 4
      %v429 = vrot.slane %v399, 3
      %v431 = vsel %vm406, %v427, %v429
      %432 = vst.msk [vmem:[%s211 + $0x9] sm:$0x3] %vm408, %v431
      %v433 = vrot.slane %v383, 5
      %v435 = vrot.slane %v399, 4
      %v437 = vsel %vm406, %v433, %v435
      %438 = vst.msk [vmem:[%s211 + $0xb] sm:$0x3] %vm408, %v437
      %v439 = vrot.slane %v383, 6
      %v441 = vrot.slane %v399, 5
      %v443 = vsel %vm406, %v439, %v441
      %444 = vst.msk [vmem:[%s211 + $0xd] sm:$0x3] %vm408, %v443
      %v445 = vrot.slane %v383, 7
      %v447 = vrot.slane %v399, 6
      %v449 = vsel %vm406, %v445, %v447
      %450 = vst.msk [vmem:[%s211 + $0xf] sm:$0x3] %vm408, %v449
      %p451 = scmp.lt.s32.totalorder %s15, 1
      %s452 = scalar_select %p451, %s15, 1
      %s453 = smul.addr %s452, 3
      %s454 = smul.addr %s453, 8
      %s455 = scalar_lea.vmem %s4, %s454
      // Predicated region
      $region37: #{tpu_custom_call.1} parent=35 // pred_check
        %p456 = pneg %p127
      $region38: #{tpu_custom_call.1} parent=35 // pred_check_branch
        %458 = sbr.rel (%p456) target = $region40
      $region39: #{tpu_custom_call.1} parent=35 // pred_region
        _
      $region40: #{tpu_custom_call.1} parent=35 // pred_fallthru
        _
    $region36: #{tpu_custom_call.1} parent=5 // pred_fallthru
      _
    %p459 = scmp.le.s32.totalorder 2, %s10
    // Predicated region
    $region41: #{tpu_custom_call.1} parent=5 // pred_check
      %p460 = pneg %p459
    $region42: #{tpu_custom_call.1} parent=5 // pred_check_branch
      %462 = sbr.rel (%p460) target = $region44
    $region43: #{tpu_custom_call.1} parent=5 // pred_region
      %s463 = ssub.s32 %s10, 2
      // Predicated region
      $region45: #{tpu_custom_call.1} parent=43 // pred_check
        %p464 = pneg %p133
      $region46: #{tpu_custom_call.1} parent=43 // pred_check_branch
        %466 = sbr.rel (%p464) target = $region48
      $region47: #{tpu_custom_call.1} parent=43 // pred_region
        %p467 = scmp.lt.s32.totalorder %s16, 1
        %s468 = scalar_select %p467, %s16, 1
        %s469 = smul.addr %s468, 3
        %s470 = smul.addr %s469, 8
        %s471 = scalar_lea.vmem %s4, %s470
      $region48: #{tpu_custom_call.1} parent=43 // pred_fallthru
        _
    $region44: #{tpu_custom_call.1} parent=5 // pred_fallthru
      _
  $region6: #{tpu_custom_call.1} parent=0 // loop_footer
    %s14 = sadd.s32 1, %s10
  $region7: #{tpu_custom_call.1} parent=0 // loop_footer_branch
    %9 = sbr.rel target = $region3
  $region8: #{tpu_custom_call.1} parent=0 // loop_exit
    _

</llo_original>
